<compile_context>
chip_gen: v7x
topology: tpu7x:2x2x1
jax: 0.10.0
libtpu: 0.0.40
codegen_flags: <defaults>
</compile_context>

<pallas_src>
import functools

import jax
import jax.numpy as jnp
from jax.experimental import pallas as pl
from jax.experimental.pallas import tpu as pltpu

IN_FEATURES = 20
OUT_FEATURES = 10

LANE = 128      # f32 lane width
SUBLANE = 8     # f32 sublane height


def linear_bias_relu_kernel(x_ref, wt_ref, bias_ref, o_ref):
    # x_ref:    (TB, IN)
    # wt_ref:   (IN, OUT)   -- already transposed on host, no in-kernel .T
    # bias_ref: (1, OUT)    -- fused (linear bias + `other`)
    # o_ref:    (TB, OUT)
    y = jnp.dot(x_ref[...], wt_ref[...], preferred_element_type=jnp.float32)
    o_ref[...] = jnp.maximum(y + bias_ref[...], 0.0).astype(o_ref.dtype)


def linear_add_relu(x, w, b, other, *, block_b=8192, force_pallas=False):
    """relu(x @ w.T + b + other) with w in torch.nn.Linear layout (OUT, IN)."""
    B = x.shape[0]

    # Host-side (one-time) prep: transpose weight, fuse the two bias terms.
    x = jnp.asarray(x, jnp.float32)
    wt = jnp.asarray(w, jnp.float32).T                                  # (IN, OUT)
    bias = (jnp.asarray(b, jnp.float32)
            + jnp.asarray(other, jnp.float32)).reshape(1, OUT_FEATURES)

    # Small-batch fast path: at tiny B the pallas_call is 100% launch /
    # pipeline overhead; a single fused XLA matmul+bias+relu is strictly
    # faster.  (Disabled when force_pallas=True so tests exercise the kernel.)
    if not force_pallas and B < 1024:
        return jnp.maximum(x @ wt + bias, 0.0)

    # ---- Tile sizing ------------------------------------------------------
    # Each row of the x block and of the out block occupies a full 128-lane
    # vreg row in VMEM (last dim padded 20->128 and 10->128), i.e.
    # 128 * 4 B = 512 B per row per buffer.  Double-buffered input + output
    # => ~2 KiB of VMEM per batch row.  tb=8192 => ~16 MiB, tb=16384 => ~32 MiB.
    tb = min(block_b, 16384)                       # keep under ~32 MiB padded
    tb = max(SUBLANE, (tb // SUBLANE) * SUBLANE)   # multiple of 8 (f32 sublane)
    b_rounded = ((B + SUBLANE - 1) // SUBLANE) * SUBLANE
    tb = min(tb, b_rounded)                        # don't tile past the batch

    # Pad the batch up to a multiple of tb (replaces the old tb=B fallback,
    # which could blow VMEM for large non-divisible B, worst on v7x).
    b_pad = ((B + tb - 1) // tb) * tb
    if b_pad != B:
        x = jnp.pad(x, ((0, b_pad - B), (0, 0)))
    grid = (b_pad // tb,)

    # Lane-padded, double-buffered footprint of the streamed operands.
    padded_bytes = 2 * 2 * tb * LANE * 4           # (x + out) * double-buffer
    # Generous headroom, capped under v7x's 64 MiB physical VMEM; also covers
    # v5e's low (16 MiB) default scoped limit when tb is large.
    vmem_limit = int(min(padded_bytes + (16 << 20), 48 << 20))

    cost = pl.CostEstimate(
        flops=2 * b_pad * IN_FEATURES * OUT_FEATURES,
        transcendentals=0,
        bytes_accessed=4 * b_pad * (IN_FEATURES + OUT_FEATURES)
        + 4 * (IN_FEATURES * OUT_FEATURES + OUT_FEATURES),
    )

    out = pl.pallas_call(
        linear_bias_relu_kernel,
        out_shape=jax.ShapeDtypeStruct((b_pad, OUT_FEATURES), jnp.float32),
        grid=grid,
        in_specs=[
            # Streamed over the batch grid.
            pl.BlockSpec((tb, IN_FEATURES), lambda i: (i, 0)),
            # Constant operands: index_map ignores the grid index so they stay
            # resident in VMEM instead of being re-fetched per tile.
            pl.BlockSpec((IN_FEATURES, OUT_FEATURES), lambda i: (0, 0)),
            pl.BlockSpec((1, OUT_FEATURES), lambda i: (0, 0)),
        ],
        out_specs=pl.BlockSpec((tb, OUT_FEATURES), lambda i: (i, 0)),
        compiler_params=pltpu.CompilerParams(
            dimension_semantics=("parallel",),     # shard batch tiles across TCs
            vmem_limit_bytes=vmem_limit,
        ),
        cost_estimate=cost,
    )(x, wt, bias)

    return out[:B]


if __name__ == "__main__":
    key = jax.random.PRNGKey(0)
    kx, kw, kb, ko, kx2 = jax.random.split(key, 5)

    # Deterministic "checkpoint-free" parameters (Linear(20, 10)).
    bound = 1.0 / (IN_FEATURES ** 0.5)
    w = jax.random.uniform(kw, (OUT_FEATURES, IN_FEATURES),
                           minval=-bound, maxval=bound, dtype=jnp.float32)
    b = jax.random.uniform(kb, (OUT_FEATURES,),
                           minval=-bound, maxval=bound, dtype=jnp.float32)

    # TODO(synk): `other` is an undefined free variable in the original
    # forward; realized here deterministically with shape (OUT_FEATURES,).
    other = jax.random.normal(ko, (OUT_FEATURES,), dtype=jnp.float32)

    fn = jax.jit(linear_add_relu, static_argnames=("block_b", "force_pallas"))

    def ref(x):
        return jnp.maximum(x @ w.T + b + other, 0.0)

    # 1) Spec shape (x1 = torch.randn(1, 20)) through the Pallas path
    #    (force_pallas=True so the kernel itself is exercised; the default
    #    small-batch fast path would bypass it).
    x1 = jax.random.normal(kx, (1, IN_FEATURES), dtype=jnp.float32)
    out1 = fn(x1, w, b, other, force_pallas=True)
    jax.block_until_ready(out1)
    assert out1.shape == (1, OUT_FEATURES)
    assert jnp.allclose(out1, ref(x1), atol=1e-5, rtol=1e-5), "mismatch (B=1)"

    # 1b) Same input via the small-batch fast path (default behaviour).
    out1_fast = fn(x1, w, b, other)
    jax.block_until_ready(out1_fast)
    assert jnp.allclose(out1_fast, ref(x1), atol=1e-5, rtol=1e-5), "mismatch (fast path)"

    # 2) Small multi-tile batch with a non-divisible B to exercise the
    #    host-padding + multi-step grid path (B=13, tile=8 -> pad to 16, grid=(2,)).
    x2 = jax.random.normal(kx2, (13, IN_FEATURES), dtype=jnp.float32)
    out2 = fn(x2, w, b, other, block_b=8, force_pallas=True)
    jax.block_until_ready(out2)
    assert out2.shape == (13, OUT_FEATURES)
    assert jnp.allclose(out2, ref(x2), atol=1e-5, rtol=1e-5), "mismatch (B=13)"

    print("KERNEL_OK")
</pallas_src>

<mosaic_0001>
module attributes {stable_mosaic.version = 11 : i64} {
  func.func @linear_bias_relu_kernel(%arg0: i32, %arg1: memref<8x20xf32, #tpu.memory_space<vmem>>, %arg2: memref<20x10xf32, #tpu.memory_space<vmem>>, %arg3: memref<1x10xf32, #tpu.memory_space<vmem>>, %arg4: memref<8x10xf32, #tpu.memory_space<vmem>>) attributes {dimension_semantics = [#tpu.dimension_semantics<parallel>], iteration_bounds = array<i64: 1>, scalar_prefetch = 0 : i64, scratch_operands = 0 : i64, tpu.core_type = #tpu.core_type<tc>, window_params = [{transform_indices = @transform_0, window_bounds = array<i64: 8, 20>}, {pipeline_mode = #tpu.pipeline_mode<synchronous>, transform_indices = @transform_1, window_bounds = array<i64: 20, 10>}, {pipeline_mode = #tpu.pipeline_mode<synchronous>, transform_indices = @transform_2, window_bounds = array<i64: 1, 10>}, {transform_indices = @transform_3, window_bounds = array<i64: 8, 10>}]} {
    %c0 = arith.constant 0 : index
    %c0_0 = arith.constant 0 : index
    %0 = vector.load %arg1[%c0, %c0_0] : memref<8x20xf32, #tpu.memory_space<vmem>>, vector<8x20xf32>
    %c0_1 = arith.constant 0 : index
    %c0_2 = arith.constant 0 : index
    %1 = vector.load %arg2[%c0_1, %c0_2] : memref<20x10xf32, #tpu.memory_space<vmem>>, vector<20x10xf32>
    %cst = arith.constant dense<0.000000e+00> : vector<8x10xf32>
    %2 = tpu.matmul %0, %1, %cst {dimension_numbers = #tpu.dot_dimension_numbers<[1], [0], [0], [1], [0, 0, 1, 1], [], []>} : vector<8x20xf32>, vector<20x10xf32>, vector<8x10xf32> -> vector<8x10xf32>
    %c0_3 = arith.constant 0 : index
    %c0_4 = arith.constant 0 : index
    %3 = vector.load %arg3[%c0_3, %c0_4] : memref<1x10xf32, #tpu.memory_space<vmem>>, vector<1x10xf32>
    %4 = vector.broadcast %3 : vector<1x10xf32> to vector<8x10xf32>
    %5 = arith.addf %2, %4 : vector<8x10xf32>
    %cst_5 = arith.constant 0.000000e+00 : f32
    %6 = vector.broadcast %cst_5 : f32 to vector<8x10xf32>
    %7 = arith.maximumf %5, %6 : vector<8x10xf32>
    %c0_6 = arith.constant 0 : index
    %c0_7 = arith.constant 0 : index
    %8 = vector.load %arg4[%c0_6, %c0_7] : memref<8x10xf32, #tpu.memory_space<vmem>>, vector<8x10xf32>
    tpu.vector_store %arg4[%c0_6, %c0_7], %7 {strides = array<i32>} : memref<8x10xf32, #tpu.memory_space<vmem>>, vector<8x10xf32>,
    return
  }
  func.func @transform_0(%arg0: i32) -> (i32, i32) {
    %c0_i32 = arith.constant 0 : i32
    %c0_i32_0 = arith.constant 0 : i32
    return %arg0, %c0_i32 : i32, i32
  }
  func.func @transform_1(%arg0: i32) -> (i32, i32) {
    %c0_i32 = arith.constant 0 : i32
    %c0_i32_0 = arith.constant 0 : i32
    %c0_i32_1 = arith.constant 0 : i32
    return %c0_i32, %c0_i32_0 : i32, i32
  }
  func.func @transform_2(%arg0: i32) -> (i32, i32) {
    %c0_i32 = arith.constant 0 : i32
    %c0_i32_0 = arith.constant 0 : i32
    %c0_i32_1 = arith.constant 0 : i32
    return %c0_i32, %c0_i32_0 : i32, i32
  }
  func.func @transform_3(%arg0: i32) -> (i32, i32) {
    %c0_i32 = arith.constant 0 : i32
    %c0_i32_0 = arith.constant 0 : i32
    return %arg0, %c0_i32 : i32, i32
  }
}

</mosaic_0001>

<llo_original>
// kernel: linear_add_relu.1
$region0: #{linear_add_relu.1}
  #allocation0 [shape = 'u32[]', space=smem, size = 0x4, offset = 0x4, fixed_abs, tag = 'smem constant byte address 0x4 - core index']
  #allocation1 [shape = 'u32[144,128]{1,0:T(1,128)}', space=vmem, size = 0x12000, scoped, tag = 'internal scratch']
  %s0 = inlined_call_operand.vmem [shape: f32[8,20], index: 0, kind: input, shape index: {}]
  %s1 = inlined_call_operand.vmem [shape: f32[20,10], index: 1, kind: input, shape index: {}]
  %s2 = inlined_call_operand.vmem [shape: f32[1,10], index: 2, kind: input, shape index: {}]
  %s3 = inlined_call_operand.vmem [shape: f32[8,10], index: 3, kind: output, shape index: {}]
  %s4 = sld [smem:[#allocation0]]
  $region22: #{linear_add_relu.1} parent=0
    _
  %s6 = ssub.s32 1, %s4
  %s7 = scalar_select 0, %s6, %s4
  // Predicated region
  $region2: #{linear_add_relu.1} parent=0 // pred_check
    _
  $region3: #{linear_add_relu.1} parent=0 // pred_check_branch
    %9 = sbr.rel (0) target = $region5
  $region4: #{linear_add_relu.1} parent=0 // pred_region
    _
  $region5: #{linear_add_relu.1} parent=0 // pred_fallthru
    _
  // Predicated region
  $region6: #{linear_add_relu.1} parent=0 // pred_check
    _
  $region7: #{linear_add_relu.1} parent=0 // pred_check_branch
    %11 = sbr.rel (0) target = $region9
  $region8: #{linear_add_relu.1} parent=0 // pred_region
    _
  $region9: #{linear_add_relu.1} parent=0 // pred_fallthru
    _
  // Predicated region
  $region10: #{linear_add_relu.1} parent=0 // pred_check
    _
  $region11: #{linear_add_relu.1} parent=0 // pred_check_branch
    %13 = sbr.rel (0) target = $region13
  $region12: #{linear_add_relu.1} parent=0 // pred_region
    _
  $region13: #{linear_add_relu.1} parent=0 // pred_fallthru
    _
  %v14 = vld [vmem:[%s0] sm:$0xff]
  %v15 = vld [vmem:[%s1] sm:$0xff]
  %v16 = vld [vmem:[%s1 + $0x8] sm:$0xff]
  %v17 = vld [vmem:[%s1 + $0x10] sm:$0xf]
  %v18 = vld [vmem:[%s2] sm:$0x1]
  %v20 = vlaneseq
  %v21 = vshrl.u32 %v20, 7
  %v22 = vsub.s32 0, %v21
  %v23 = vrot.slane %v18, %v22
  %vm25 = vcmask 162816
  %v27 = vsel %vm25, %v14, 0
  %vm29 = vcmask 1043456
  %v31 = vsel %vm29, %v17, 0
  %33 = vmatprep.subr.mxu0 0.0
  %34 = vmatpush1.msra.mxu0 %v15
  %35 = vmatprep.subr.mxu0 0.0
  %36 = vmatpush1.msra.mxu0 %v16
  %37 = vmatprep.subr.mxu0 0.0
  %38 = vmatpush1.msra.mxu0 %v31
  %39 = vmatprep.subr.mxu0 0.0
  %40 = vmatpush1.msra.mxu0 0.0
  %41 = vmatprep.subr.mxu0 0.0
  %42 = vmatpush1.msra.mxu0 0.0
  %43 = vmatprep.subr.mxu0 0.0
  %44 = vmatpush1.msra.mxu0 0.0
  %45 = vmatprep.subr.mxu0 0.0
  %46 = vmatpush1.msra.mxu0 0.0
  %47 = vmatprep.subr.mxu0 0.0
  %48 = vmatpush1.msra.mxu0 0.0
  %49 = vmatprep.subr.mxu0 0.0
  %50 = vmatpush1.msra.mxu0 0.0
  %51 = vmatprep.subr.mxu0 0.0
  %52 = vmatpush1.msra.mxu0 0.0
  %53 = vmatprep.subr.mxu0 0.0
  %54 = vmatpush1.msra.mxu0 0.0
  %55 = vmatprep.subr.mxu0 0.0
  %56 = vmatpush1.msra.mxu0 0.0
  %57 = vmatprep.subr.mxu0 0.0
  %58 = vmatpush1.msra.mxu0 0.0
  %59 = vmatprep.subr.mxu0 0.0
  %60 = vmatpush1.msra.mxu0 0.0
  %61 = vmatprep.subr.mxu0 0.0
  %62 = vmatpush1.msra.mxu0 0.0
  %63 = vmatprep.subr.mxu0 0.0
  %64 = vmatpush1.msra.mxu0 0.0
  %65 = vmatprep.subr.mxu0 0.0
  %66 = vmatpush1.msra.mxu0 0.0
  %67 = vmatprep.subr.mxu0 0.0
  %68 = vmatpush1.msra.mxu0 0.0
  %69 = vmatprep.subr.mxu0 0.0
  %70 = vmatpush1.msra.mxu0 0.0
  %71 = vmatprep.subr.mxu0 0.0
  %72 = vmatpush1.msra.mxu0 0.0
  %73 = vmatprep.subr.mxu0 0.0
  %74 = vmatpush1.msra.mxu0 0.0
  %75 = vmatprep.subr.mxu0 0.0
  %76 = vmatpush1.msra.mxu0 0.0
  %77 = vmatprep.subr.mxu0 0.0
  %78 = vmatpush1.msra.mxu0 0.0
  %79 = vmatprep.subr.mxu0 0.0
  %80 = vmatpush1.msra.mxu0 0.0
  %81 = vmatprep.subr.mxu0 0.0
  %82 = vmatpush1.msra.mxu0 0.0
  %83 = vmatprep.subr.mxu0 0.0
  %84 = vmatpush1.msra.mxu0 0.0
  %85 = vmatprep.subr.mxu0 0.0
  %86 = vmatpush1.msra.mxu0 0.0
  %87 = vmatprep.subr.mxu0 0.0
  %88 = vmatpush1.msra.mxu0 0.0
  %89 = vmatprep.subr.mxu0 0.0
  %90 = vmatpush1.msra.mxu0 0.0
  %91 = vmatprep.subr.mxu0 0.0
  %92 = vmatpush1.msra.mxu0 0.0
  %93 = vmatprep.subr.mxu0 0.0
  %94 = vmatpush1.msra.mxu0 0.0
  %95 = vmatprep.subr.mxu0 0.0
  %96 = vmatpush1.msra.mxu0 0.0
  %97 = vmatprep.mubr.f32.mxu0 0.0
  %98 = vmatmul.mubr.f32.gmra.mrb[0].mxu0 %v27
  %v99 = vpop.f32.mrb[0].mxu0
  %v100 = vadd.f32 %v23, %v99
  %v101 = vpop.f32.mrb[0].mxu0
  %102 = vdwg.mxu0
  %v103 = vmax.f32 %v100, 0.0
  %vm104 = vcmask 80896
  %105 = vst.msk [vmem:[%s3] sm:$0xff] %vm104, %v103
  // Predicated region
  $region14: #{linear_add_relu.1} parent=0 // pred_check
    _
  $region15: #{linear_add_relu.1} parent=0 // pred_check_branch
    %107 = sbr.rel (0) target = $region17
  $region16: #{linear_add_relu.1} parent=0 // pred_region
    _
  $region17: #{linear_add_relu.1} parent=0 // pred_fallthru
    _
  // Predicated region
  $region18: #{linear_add_relu.1} parent=0 // pred_check
    _
  $region19: #{linear_add_relu.1} parent=0 // pred_check_branch
    %109 = sbr.rel (0) target = $region21
  $region20: #{linear_add_relu.1} parent=0 // pred_region
    _
  $region21: #{linear_add_relu.1} parent=0 // pred_fallthru
    _

</llo_original>
